<compile_context>
chip_gen: v7x
topology: tpu7x:2x2x1
jax: 0.10.0
libtpu: 0.0.40
codegen_flags: <defaults>
</compile_context>

<pallas_src>
import jax
import jax.numpy as jnp
from jax import lax
from jax.experimental import pallas as pl
from jax.experimental.pallas import tpu as pltpu


def _base_model_kernel(x_ref, pq_ref, w_ref, b_ref, c_ref, out_ref):
    # x_ref: (TB, F), pq_ref: (TB, K), w_ref: (F, K), b_ref: (1, K)
    x = x_ref[...]
    w = w_ref[...]
    bias = b_ref[...]

    # Coefficient head on the MXU, f32 accumulate.
    c = jnp.dot(x, w, preferred_element_type=jnp.float32) + bias      # (TB, K)
    c_ref[...] = c

    # Coefficient-weighted basis combination, reduced over K with the batch
    # landing on the LANE axis: ones(1,K) contracted against weighted's K axis
    # -> (1, TB).  Keeps the per-row output lane-dense (TB multiple of 128)
    # instead of a width-1 masked-store column.
    weighted = c * pq_ref[...]                                         # (TB, K)
    ones = jnp.ones((1, w_ref.shape[1]), dtype=jnp.float32)
    out_ref[...] = lax.dot_general(
        ones, weighted,
        dimension_numbers=(((1,), (1,)), ((), ())),
        preferred_element_type=jnp.float32,
    )                                                                  # (1, TB)


def base_model_forward(x, pq, w, b, *, tb=512):
    """Returns (coefficients (B, K), predictions (B,)) — predict()'s (c, out)."""
    B, F = x.shape
    K = pq.shape[1]
    assert w.shape == (F, K) and b.shape == (1, K)
    assert tb % 128 == 0, "row tile must keep the (1, TB) output lane-dense"

    x = x.astype(jnp.float32)
    pq = pq.astype(jnp.float32)
    w = w.astype(jnp.float32)
    b = b.astype(jnp.float32)

    grid = (pl.cdiv(B, tb),)
    cost = pl.CostEstimate(
        flops=2 * B * F * K + 4 * B * K,
        transcendentals=0,
        bytes_accessed=4 * (B * F + 2 * B * K + F * K + K + B),
    )

    c, out2d = pl.pallas_call(
        _base_model_kernel,
        out_shape=(
            jax.ShapeDtypeStruct((B, K), jnp.float32),
            jax.ShapeDtypeStruct((1, B), jnp.float32),
        ),
        grid=grid,
        in_specs=[
            pl.BlockSpec((tb, F), lambda i: (i, 0)),   # x: tiled over batch
            pl.BlockSpec((tb, K), lambda i: (i, 0)),   # pq: tiled over batch
            pl.BlockSpec((F, K), lambda i: (0, 0)),    # W: VMEM-resident
            pl.BlockSpec((1, K), lambda i: (0, 0)),    # b: VMEM-resident
        ],
        out_specs=(
            pl.BlockSpec((tb, K), lambda i: (i, 0)),   # c: natural (B, K)
            pl.BlockSpec((1, tb), lambda i: (0, i)),   # out: batch on lanes
        ),
        compiler_params=pltpu.CompilerParams(
            dimension_semantics=("parallel",),          # megacore on v7x
        ),
        cost_estimate=cost,
    )(x, pq, w, b)

    return c, out2d[0]


if __name__ == "__main__":
    key = jax.random.PRNGKey(0)
    kx, kpq, kw, kb = jax.random.split(key, 4)

    # Small demo shapes: 2 batch tiles of 512 rows, 8 basis coefficients.
    B, F, K = 1024, 32, 8
    x = jax.random.normal(kx, (B, F), dtype=jnp.float32)
    pq = jax.random.normal(kpq, (B, K), dtype=jnp.float32)

    # Deterministic synthetic parameters for the coefficient head.
    w = jax.random.normal(kw, (F, K), dtype=jnp.float32) * 0.1
    b = jax.random.normal(kb, (1, K), dtype=jnp.float32) * 0.01

    c, out = base_model_forward(x, pq, w, b)
    jax.block_until_ready((c, out))

    # Reference check in plain JAX.
    c_ref = x @ w + b
    out_ref = jnp.sum(c_ref * pq, axis=-1)
    assert c.shape == (B, K) and out.shape == (B,)
    assert jnp.allclose(c, c_ref, atol=1e-4, rtol=1e-4), "coefficients mismatch"
    assert jnp.allclose(out, out_ref, atol=1e-4, rtol=1e-4), "predictions mismatch"

    print("KERNEL_OK")
</pallas_src>

<mosaic_0001>
module attributes {stable_mosaic.version = 11 : i64} {
  func.func @_base_model_kernel(%arg0: i32, %arg1: memref<512x32xf32, #tpu.memory_space<vmem>>, %arg2: memref<512x8xf32, #tpu.memory_space<vmem>>, %arg3: memref<32x8xf32, #tpu.memory_space<vmem>>, %arg4: memref<1x8xf32, #tpu.memory_space<vmem>>, %arg5: memref<512x8xf32, #tpu.memory_space<vmem>>, %arg6: memref<1x512xf32, #tpu.memory_space<vmem>>) attributes {dimension_semantics = [#tpu.dimension_semantics<parallel>], iteration_bounds = array<i64: 2>, scalar_prefetch = 0 : i64, scratch_operands = 0 : i64, tpu.core_type = #tpu.core_type<tc>, window_params = [{transform_indices = @transform_0, window_bounds = array<i64: 512, 32>}, {transform_indices = @transform_1, window_bounds = array<i64: 512, 8>}, {pipeline_mode = #tpu.pipeline_mode<synchronous>, transform_indices = @transform_2, window_bounds = array<i64: 32, 8>}, {pipeline_mode = #tpu.pipeline_mode<synchronous>, transform_indices = @transform_3, window_bounds = array<i64: 1, 8>}, {transform_indices = @transform_4, window_bounds = array<i64: 512, 8>}, {transform_indices = @transform_5, window_bounds = array<i64: 1, 512>}]} {
    %c0 = arith.constant 0 : index
    %c0_0 = arith.constant 0 : index
    %0 = vector.load %arg1[%c0, %c0_0] : memref<512x32xf32, #tpu.memory_space<vmem>>, vector<512x32xf32>
    %c0_1 = arith.constant 0 : index
    %c0_2 = arith.constant 0 : index
    %1 = vector.load %arg3[%c0_1, %c0_2] : memref<32x8xf32, #tpu.memory_space<vmem>>, vector<32x8xf32>
    %c0_3 = arith.constant 0 : index
    %c0_4 = arith.constant 0 : index
    %2 = vector.load %arg4[%c0_3, %c0_4] : memref<1x8xf32, #tpu.memory_space<vmem>>, vector<1x8xf32>
    %cst = arith.constant dense<0.000000e+00> : vector<512x8xf32>
    %3 = tpu.matmul %0, %1, %cst {dimension_numbers = #tpu.dot_dimension_numbers<[1], [0], [0], [1], [0, 0, 1, 1], [], []>} : vector<512x32xf32>, vector<32x8xf32>, vector<512x8xf32> -> vector<512x8xf32>
    %4 = vector.broadcast %2 : vector<1x8xf32> to vector<512x8xf32>
    %5 = arith.addf %3, %4 : vector<512x8xf32>
    %c0_5 = arith.constant 0 : index
    %c0_6 = arith.constant 0 : index
    %6 = vector.load %arg5[%c0_5, %c0_6] : memref<512x8xf32, #tpu.memory_space<vmem>>, vector<512x8xf32>
    tpu.vector_store %arg5[%c0_5, %c0_6], %5 {strides = array<i32>} : memref<512x8xf32, #tpu.memory_space<vmem>>, vector<512x8xf32>,
    %c0_7 = arith.constant 0 : index
    %c0_8 = arith.constant 0 : index
    %7 = vector.load %arg2[%c0_7, %c0_8] : memref<512x8xf32, #tpu.memory_space<vmem>>, vector<512x8xf32>
    %8 = arith.mulf %5, %7 : vector<512x8xf32>
    %cst_9 = arith.constant 1.000000e+00 : f32
    %9 = vector.broadcast %cst_9 : f32 to vector<1x8xf32>
    %cst_10 = arith.constant dense<0.000000e+00> : vector<1x512xf32>
    %10 = tpu.matmul %9, %8, %cst_10 {dimension_numbers = #tpu.dot_dimension_numbers<[1], [1], [0], [0], [0, 0, 1, 0], [], []>} : vector<1x8xf32>, vector<512x8xf32>, vector<1x512xf32> -> vector<1x512xf32>
    %c0_11 = arith.constant 0 : index
    %c0_12 = arith.constant 0 : index
    %11 = vector.load %arg6[%c0_11, %c0_12] : memref<1x512xf32, #tpu.memory_space<vmem>>, vector<1x512xf32>
    tpu.vector_store %arg6[%c0_11, %c0_12], %10 {strides = array<i32>} : memref<1x512xf32, #tpu.memory_space<vmem>>, vector<1x512xf32>,
    return
  }
  func.func @transform_0(%arg0: i32) -> (i32, i32) {
    %c0_i32 = arith.constant 0 : i32
    %c0_i32_0 = arith.constant 0 : i32
    return %arg0, %c0_i32 : i32, i32
  }
  func.func @transform_1(%arg0: i32) -> (i32, i32) {
    %c0_i32 = arith.constant 0 : i32
    %c0_i32_0 = arith.constant 0 : i32
    return %arg0, %c0_i32 : i32, i32
  }
  func.func @transform_2(%arg0: i32) -> (i32, i32) {
    %c0_i32 = arith.constant 0 : i32
    %c0_i32_0 = arith.constant 0 : i32
    %c0_i32_1 = arith.constant 0 : i32
    return %c0_i32, %c0_i32_0 : i32, i32
  }
  func.func @transform_3(%arg0: i32) -> (i32, i32) {
    %c0_i32 = arith.constant 0 : i32
    %c0_i32_0 = arith.constant 0 : i32
    %c0_i32_1 = arith.constant 0 : i32
    return %c0_i32, %c0_i32_0 : i32, i32
  }
  func.func @transform_4(%arg0: i32) -> (i32, i32) {
    %c0_i32 = arith.constant 0 : i32
    %c0_i32_0 = arith.constant 0 : i32
    return %arg0, %c0_i32 : i32, i32
  }
  func.func @transform_5(%arg0: i32) -> (i32, i32) {
    %c0_i32 = arith.constant 0 : i32
    %c0_i32_0 = arith.constant 0 : i32
    return %c0_i32, %arg0 : i32, i32
  }
}

</mosaic_0001>

<llo_original>
// kernel: tpu_custom_call.1
$region0: #{tpu_custom_call.1}
  #allocation0 [shape = 'u32[]', space=smem, size = 0x4, offset = 0x4, fixed_abs, tag = 'smem constant byte address 0x4 - core index']
  #allocation1 [shape = 'u32[144,128]{1,0:T(1,128)}', space=vmem, size = 0x12000, scoped, tag = 'internal scratch']
  %s0 = inlined_call_operand.vmem [shape: f32[1024,32], index: 0, kind: input, shape index: {}]
  %s1 = inlined_call_operand.vmem [shape: f32[1024,8], index: 1, kind: input, shape index: {}]
  %s2 = inlined_call_operand.vmem [shape: f32[32,8], index: 2, kind: input, shape index: {}]
  %s3 = inlined_call_operand.vmem [shape: f32[1,8], index: 3, kind: input, shape index: {}]
  %s4 = inlined_call_operand.vmem [shape: f32[1024,8], index: 4, kind: output, shape index: {0}]
  %s5 = inlined_call_operand.hbm [shape: f32[1,1024], index: 5, kind: output, shape index: {1}]
  %6 = xla_tuple %s4, %s5
  %s7 = sld [smem:[#allocation0]]
  $region57: #{tpu_custom_call.1} parent=0
    _
  %s9 = ssub.s32 1, %s7
  %s10 = scalar_select 0, %s9, %s7
  $region1: #{tpu_custom_call.1} parent=0
    #allocation2 [shape = 'u8[4096]{0}', space=vmem, size = 0x1000, scoped, tag = 'output window, operand 1']
    #allocation3 [shape = 's32[2]{0}', space=sflag, size = 0x8, scoped, tag = 'scoped memory for tpu_custom_call.1']
    %11 = vsyncpa [#allocation3], 0
    %s12 = scalar_lea.sflag [#allocation3], 1
    %13 = vsyncpa %s12, 0
    loop: start=0, step=1, limit=4
    $region2: #{tpu_custom_call.1} parent=1 // loop_pre_header
      _
    $region3: #{tpu_custom_call.1} parent=1 // loop_header
      %s15 = sphi 0, %s19
      %p16 = scmp.ge.s32.totalorder %s15, 4
      %s25 = sphi 0, %s27
      %s28 = sphi 0, %s25
      %s29 = sphi 0, %s28
      %s45 = sphi 0, %s29
      %s51 = sphi 0, %s53
      %s54 = sphi 0, %s51
      %s55 = sphi 0, %s54
      %s71 = sphi 0, %s55
      %s75 = sphi 0, %s75
      %s77 = sphi 0, %s75
      %s78 = sphi 0, %s77
      %s92 = sphi 0, %s78
      %s96 = sphi 0, %s96
      %s98 = sphi 0, %s96
      %s99 = sphi 0, %s98
      %s113 = sphi 0, %s99
      %s119 = sphi 0, %s121
      %s122 = sphi 0, %s119
      %s123 = sphi 0, %s122
      %s139 = sphi 0, %s123
      %s145 = sphi 0, %s147
      %s148 = sphi 0, %s145
      %s149 = sphi 0, %s148
      %s165 = sphi 0, %s149
    $region4: #{tpu_custom_call.1} parent=1 // loop_header_branch
      %18 = sbr.rel (%p16) target = $region8
    $region5: #{tpu_custom_call.1} parent=1 // loop_body
      %s20 = ssub.s32 %s15, 1
      %s21 = ssub.s32 %s15, 2
      %s22 = sadd.s32 %s15, 1
      %s23 = ssub.s32 %s15, %s22
      %p24 = scmp.eq.s32.totalorder %s23, 0
      %s26 = sadd.s32 %s25, 1
      %s27 = scalar_select %p24, %s25, %s26
      %p30 = pneg %p24
      %p31 = scmp.eq.s32.totalorder %s15, 1
      %p32 = por %p30, %p31
      %p33 = scmp.ne.s32.totalorder %s25, %s28
      %p34 = scmp.eq.s32.totalorder %s15, 0
      %p35 = por %p33, %p34
      %p36 = scmp.ne.s32.totalorder %s25, %s28
      %p37 = scmp.eq.s32.totalorder %s20, 1
      %p38 = por %p36, %p37
      %p39 = scmp.ne.s32.totalorder %s28, %s29
      %p40 = scmp.eq.s32.totalorder %s20, 0
      %p41 = por %p39, %p40
      %p42 = scmp.ne.s32.totalorder %s28, %s29
      %p43 = scmp.eq.s32.totalorder %s21, 1
      %p44 = por %p42, %p43
      %p46 = scmp.ne.s32.totalorder %s29, %s45
      %p47 = scmp.eq.s32.totalorder %s21, 0
      %p48 = por %p46, %p47
      %s49 = ssub.s32 %s15, %s22
      %p50 = scmp.eq.s32.totalorder %s49, 0
      %s52 = sadd.s32 %s51, 1
      %s53 = scalar_select %p50, %s51, %s52
      %p56 = pneg %p50
      %p57 = scmp.eq.s32.totalorder %s15, 1
      %p58 = por %p56, %p57
      %p59 = scmp.ne.s32.totalorder %s51, %s54
      %p60 = scmp.eq.s32.totalorder %s15, 0
      %p61 = por %p59, %p60
      %p62 = scmp.ne.s32.totalorder %s51, %s54
      %p63 = scmp.eq.s32.totalorder %s20, 1
      %p64 = por %p62, %p63
      %p65 = scmp.ne.s32.totalorder %s54, %s55
      %p66 = scmp.eq.s32.totalorder %s20, 0
      %p67 = por %p65, %p66
      %p68 = scmp.ne.s32.totalorder %s54, %s55
      %p69 = scmp.eq.s32.totalorder %s21, 1
      %p70 = por %p68, %p69
      %p72 = scmp.ne.s32.totalorder %s55, %s71
      %p73 = scmp.eq.s32.totalorder %s21, 0
      %p74 = por %p72, %p73
      %s76 = sadd.s32 %s75, 1
      %p79 = scmp.eq.s32.totalorder %s15, 1
      %p80 = scmp.ne.s32.totalorder %s75, %s77
      %p81 = scmp.eq.s32.totalorder %s15, 0
      %p82 = por %p80, %p81
      %p83 = scmp.ne.s32.totalorder %s75, %s77
      %p84 = scmp.eq.s32.totalorder %s20, 1
      %p85 = por %p83, %p84
      %p86 = scmp.ne.s32.totalorder %s77, %s78
      %p87 = scmp.eq.s32.totalorder %s20, 0
      %p88 = por %p86, %p87
      %p89 = scmp.ne.s32.totalorder %s77, %s78
      %p90 = scmp.eq.s32.totalorder %s21, 1
      %p91 = por %p89, %p90
      %p93 = scmp.ne.s32.totalorder %s78, %s92
      %p94 = scmp.eq.s32.totalorder %s21, 0
      %p95 = por %p93, %p94
      %s97 = sadd.s32 %s96, 1
      %p100 = scmp.eq.s32.totalorder %s15, 1
      %p101 = scmp.ne.s32.totalorder %s96, %s98
      %p102 = scmp.eq.s32.totalorder %s15, 0
      %p103 = por %p101, %p102
      %p104 = scmp.ne.s32.totalorder %s96, %s98
      %p105 = scmp.eq.s32.totalorder %s20, 1
      %p106 = por %p104, %p105
      %p107 = scmp.ne.s32.totalorder %s98, %s99
      %p108 = scmp.eq.s32.totalorder %s20, 0
      %p109 = por %p107, %p108
      %p110 = scmp.ne.s32.totalorder %s98, %s99
      %p111 = scmp.eq.s32.totalorder %s21, 1
      %p112 = por %p110, %p111
      %p114 = scmp.ne.s32.totalorder %s99, %s113
      %p115 = scmp.eq.s32.totalorder %s21, 0
      %p116 = por %p114, %p115
      %s117 = ssub.s32 %s15, %s22
      %p118 = scmp.eq.s32.totalorder %s117, 0
      %s120 = sadd.s32 %s119, 1
      %s121 = scalar_select %p118, %s119, %s120
      %p124 = pneg %p118
      %p125 = scmp.eq.s32.totalorder %s15, 1
      %p126 = por %p124, %p125
      %p127 = scmp.ne.s32.totalorder %s119, %s122
      %p128 = scmp.eq.s32.totalorder %s15, 0
      %p129 = por %p127, %p128
      %p130 = scmp.ne.s32.totalorder %s119, %s122
      %p131 = scmp.eq.s32.totalorder %s20, 1
      %p132 = por %p130, %p131
      %p133 = scmp.ne.s32.totalorder %s122, %s123
      %p134 = scmp.eq.s32.totalorder %s20, 0
      %p135 = por %p133, %p134
      %p136 = scmp.ne.s32.totalorder %s122, %s123
      %p137 = scmp.eq.s32.totalorder %s21, 1
      %p138 = por %p136, %p137
      %p140 = scmp.ne.s32.totalorder %s123, %s139
      %p141 = scmp.eq.s32.totalorder %s21, 0
      %p142 = por %p140, %p141
      %s143 = ssub.s32 %s15, %s22
      %p144 = scmp.eq.s32.totalorder %s143, 0
      %s146 = sadd.s32 %s145, 1
      %s147 = scalar_select %p144, %s145, %s146
      %p150 = pneg %p144
      %p151 = scmp.eq.s32.totalorder %s15, 1
      %p152 = por %p150, %p151
      %p153 = scmp.ne.s32.totalorder %s145, %s148
      %p154 = scmp.eq.s32.totalorder %s15, 0
      %p155 = por %p153, %p154
      %p156 = scmp.ne.s32.totalorder %s145, %s148
      %p157 = scmp.eq.s32.totalorder %s20, 1
      %p158 = por %p156, %p157
      %p159 = scmp.ne.s32.totalorder %s148, %s149
      %p160 = scmp.eq.s32.totalorder %s20, 0
      %p161 = por %p159, %p160
      %p162 = scmp.ne.s32.totalorder %s148, %s149
      %p163 = scmp.eq.s32.totalorder %s21, 1
      %p164 = por %p162, %p163
      %p166 = scmp.ne.s32.totalorder %s149, %s165
      %p167 = scmp.eq.s32.totalorder %s21, 0
      %p168 = por %p166, %p167
      %p169 = scmp.le.s32.totalorder 1, %s15
      %p170 = scmp.lt.s32.totalorder %s15, 3
      %p171 = pnand %p169, %p170
      %p172 = pneg %p171
      // Predicated region
      $region9: #{tpu_custom_call.1} parent=5 // pred_check
        _
      $region10: #{tpu_custom_call.1} parent=5 // pred_check_branch
        %174 = sbr.rel (%p171) target = $region12
      $region11: #{tpu_custom_call.1} parent=5 // pred_region
        %s175 = ssub.s32 %s15, 1
        // Predicated region
        $region13: #{tpu_custom_call.1} parent=11 // pred_check
          %p176 = pneg %p88
        $region14: #{tpu_custom_call.1} parent=11 // pred_check_branch
          %178 = sbr.rel (%p176) target = $region16
        $region15: #{tpu_custom_call.1} parent=11 // pred_region
          _
        $region16: #{tpu_custom_call.1} parent=11 // pred_fallthru
          _
        // Predicated region
        $region17: #{tpu_custom_call.1} parent=11 // pred_check
          %p179 = pneg %p109
        $region18: #{tpu_custom_call.1} parent=11 // pred_check_branch
          %181 = sbr.rel (%p179) target = $region20
        $region19: #{tpu_custom_call.1} parent=11 // pred_region
          _
        $region20: #{tpu_custom_call.1} parent=11 // pred_fallthru
          _
      $region12: #{tpu_custom_call.1} parent=5 // pred_fallthru
        _
      %p182 = scmp.lt.s32.totalorder %s15, 2
      // Predicated region
      $region21: #{tpu_custom_call.1} parent=5 // pred_check
        %p183 = pneg %p182
      $region22: #{tpu_custom_call.1} parent=5 // pred_check_branch
        %185 = sbr.rel (%p183) target = $region24
      $region23: #{tpu_custom_call.1} parent=5 // pred_region
        // Predicated region
        $region25: #{tpu_custom_call.1} parent=23 // pred_check
          %p186 = pneg %p35
        $region26: #{tpu_custom_call.1} parent=23 // pred_check_branch
          %188 = sbr.rel (%p186) target = $region28
        $region27: #{tpu_custom_call.1} parent=23 // pred_region
          %s189 = smul.u32 64, %s15
          %p190 = scmp.lt.s32.totalorder %s189, 127
          %s191 = scalar_select %p190, %s189, 127
          %s192 = smul.addr %s191, 8
          %s193 = scalar_lea.vmem %s0, %s192
          %s194 = smul.u32 64, %s15
        $region28: #{tpu_custom_call.1} parent=23 // pred_fallthru
          _
        // Predicated region
        $region29: #{tpu_custom_call.1} parent=23 // pred_check
          %p195 = pneg %p61
        $region30: #{tpu_custom_call.1} parent=23 // pred_check_branch
          %197 = sbr.rel (%p195) target = $region32
        $region31: #{tpu_custom_call.1} parent=23 // pred_region
          %s198 = smul.u32 64, %s15
          %p199 = scmp.lt.s32.totalorder %s198, 127
          %s200 = scalar_select %p199, %s198, 127
          %s201 = smul.addr %s200, 8
          %s202 = scalar_lea.vmem %s1, %s201
          %s203 = smul.u32 64, %s15
        $region32: #{tpu_custom_call.1} parent=23 // pred_fallthru
          _
      $region24: #{tpu_custom_call.1} parent=5 // pred_fallthru
        _
      %p204 = scmp.le.s32.totalorder 1, %s15
      %p205 = scmp.lt.s32.totalorder %s15, 3
      %p206 = pnand %p204, %p205
      %p207 = pneg %p206
      // Predicated region
      $region33: #{tpu_custom_call.1} parent=5 // pred_check
        _
      $region34: #{tpu_custom_call.1} parent=5 // pred_check_branch
        %209 = sbr.rel (%p206) target = $region36
      $region35: #{tpu_custom_call.1} parent=5 // pred_region
        %s210 = ssub.s32 %s15, 1
        %s211 = smul.u32 64, %s20
        %p212 = scmp.lt.s32.totalorder %s211, 127
        %s213 = scalar_select %p212, %s211, 127
        %s214 = smul.addr %s213, 8
        %s215 = scalar_lea.vmem %s0, %s214
        %p216 = pneg %p41
        %p217 = pneg %p38
        %s218 = smul.u32 64, %s20
        %p219 = scmp.lt.s32.totalorder %s218, 127
        %s220 = scalar_select %p219, %s218, 127
        %s221 = smul.addr %s220, 8
        %s222 = scalar_lea.vmem %s1, %s221
        %p223 = pneg %p67
        %p224 = pneg %p64
        %p225 = pneg %p88
        %p226 = pneg %p85
        %p227 = pneg %p109
        %p228 = pneg %p106
        %p229 = pneg %p135
        %p230 = pneg %p132
        %s231 = smul.u32 64, %s20
        %p232 = scmp.lt.s32.totalorder %s231, 127
        %s233 = scalar_select %p232, %s231, 127
        %s234 = smul.addr %s233, 8
        %s235 = scalar_lea.vmem %s4, %s234
        %p236 = pneg %p161
        %p237 = pneg %p158
        %s238 = sand.u32 %s148, 1
        %s239 = scalar_lea.sflag [#allocation3], %s238
        %s240 = sand.u32 %s148, 1
        %s241 = smul.addr %s240, 4
        %s242 = scalar_lea.vmem [#allocation2], %s241
        %s243 = smul.u32 64, %s20
        %p244 = scmp.lt.s32.totalorder %s243, 127
        %s245 = scalar_select %p244, %s243, 127
        %s246 = smul.addr %s245, 8
        %s247 = scalar_lea.vmem %s0, %s246
        %s248 = smul.u32 64, %s20
        %s249 = smul.u32 64, %s20
        %p250 = scmp.lt.s32.totalorder %s249, 127
        %s251 = scalar_select %p250, %s249, 127
        %s252 = smul.addr %s251, 8
        %s253 = scalar_lea.vmem %s1, %s252
        %s254 = smul.u32 64, %s20
        %s255 = smul.u32 64, %s20
        %p256 = scmp.lt.s32.totalorder %s255, 127
        %s257 = scalar_select %p256, %s255, 127
        %s258 = smul.addr %s257, 8
        %s259 = scalar_lea.vmem %s4, %s258
        %s260 = smul.u32 64, %s20
        %s261 = smul.u32 4, %s20
        %v262 = vld [vmem:[%s247] sm:$0xff]
        %v263 = vld [vmem:[%s247 + $0x8] sm:$0xff]
        %v264 = vld [vmem:[%s247 + $0x10] sm:$0xff]
        %v265 = vld [vmem:[%s247 + $0x18] sm:$0xff]
        %v266 = vld [vmem:[%s247 + $0x20] sm:$0xff]
        %v267 = vld [vmem:[%s247 + $0x28] sm:$0xff]
        %v268 = vld [vmem:[%s247 + $0x30] sm:$0xff]
        %v269 = vld [vmem:[%s247 + $0x38] sm:$0xff]
        %v270 = vld [vmem:[%s247 + $0x40] sm:$0xff]
        %v271 = vld [vmem:[%s247 + $0x48] sm:$0xff]
        %v272 = vld [vmem:[%s247 + $0x50] sm:$0xff]
        %v273 = vld [vmem:[%s247 + $0x58] sm:$0xff]
        %v274 = vld [vmem:[%s247 + $0x60] sm:$0xff]
        %v275 = vld [vmem:[%s247 + $0x68] sm:$0xff]
        %v276 = vld [vmem:[%s247 + $0x70] sm:$0xff]
        %v277 = vld [vmem:[%s247 + $0x78] sm:$0xff]
        %v278 = vld [vmem:[%s247 + $0x80] sm:$0xff]
        %v279 = vld [vmem:[%s247 + $0x88] sm:$0xff]
        %v280 = vld [vmem:[%s247 + $0x90] sm:$0xff]
        %v281 = vld [vmem:[%s247 + $0x98] sm:$0xff]
        %v282 = vld [vmem:[%s247 + $0xa0] sm:$0xff]
        %v283 = vld [vmem:[%s247 + $0xa8] sm:$0xff]
        %v284 = vld [vmem:[%s247 + $0xb0] sm:$0xff]
        %v285 = vld [vmem:[%s247 + $0xb8] sm:$0xff]
        %v286 = vld [vmem:[%s247 + $0xc0] sm:$0xff]
        %v287 = vld [vmem:[%s247 + $0xc8] sm:$0xff]
        %v288 = vld [vmem:[%s247 + $0xd0] sm:$0xff]
        %v289 = vld [vmem:[%s247 + $0xd8] sm:$0xff]
        %v290 = vld [vmem:[%s247 + $0xe0] sm:$0xff]
        %v291 = vld [vmem:[%s247 + $0xe8] sm:$0xff]
        %v292 = vld [vmem:[%s247 + $0xf0] sm:$0xff]
        %v293 = vld [vmem:[%s247 + $0xf8] sm:$0xff]
        %v294 = vld [vmem:[%s247 + $0x100] sm:$0xff]
        %v295 = vld [vmem:[%s247 + $0x108] sm:$0xff]
        %v296 = vld [vmem:[%s247 + $0x110] sm:$0xff]
        %v297 = vld [vmem:[%s247 + $0x118] sm:$0xff]
        %v298 = vld [vmem:[%s247 + $0x120] sm:$0xff]
        %v299 = vld [vmem:[%s247 + $0x128] sm:$0xff]
        %v300 = vld [vmem:[%s247 + $0x130] sm:$0xff]
        %v301 = vld [vmem:[%s247 + $0x138] sm:$0xff]
        %v302 = vld [vmem:[%s247 + $0x140] sm:$0xff]
        %v303 = vld [vmem:[%s247 + $0x148] sm:$0xff]
        %v304 = vld [vmem:[%s247 + $0x150] sm:$0xff]
        %v305 = vld [vmem:[%s247 + $0x158] sm:$0xff]
        %v306 = vld [vmem:[%s247 + $0x160] sm:$0xff]
        %v307 = vld [vmem:[%s247 + $0x168] sm:$0xff]
        %v308 = vld [vmem:[%s247 + $0x170] sm:$0xff]
        %v309 = vld [vmem:[%s247 + $0x178] sm:$0xff]
        %v310 = vld [vmem:[%s247 + $0x180] sm:$0xff]
        %v311 = vld [vmem:[%s247 + $0x188] sm:$0xff]
        %v312 = vld [vmem:[%s247 + $0x190] sm:$0xff]
        %v313 = vld [vmem:[%s247 + $0x198] sm:$0xff]
        %v314 = vld [vmem:[%s247 + $0x1a0] sm:$0xff]
        %v315 = vld [vmem:[%s247 + $0x1a8] sm:$0xff]
        %v316 = vld [vmem:[%s247 + $0x1b0] sm:$0xff]
        %v317 = vld [vmem:[%s247 + $0x1b8] sm:$0xff]
        %v318 = vld [vmem:[%s247 + $0x1c0] sm:$0xff]
        %v319 = vld [vmem:[%s247 + $0x1c8] sm:$0xff]
        %v320 = vld [vmem:[%s247 + $0x1d0] sm:$0xff]
        %v321 = vld [vmem:[%s247 + $0x1d8] sm:$0xff]
        %v322 = vld [vmem:[%s247 + $0x1e0] sm:$0xff]
        %v323 = vld [vmem:[%s247 + $0x1e8] sm:$0xff]
        %v324 = vld [vmem:[%s247 + $0x1f0] sm:$0xff]
        %v325 = vld [vmem:[%s247 + $0x1f8] sm:$0xff]
        %v326 = vld [vmem:[%s2] sm:$0xff]
        %v327 = vld [vmem:[%s2 + $0x8] sm:$0xff]
        %v328 = vld [vmem:[%s2 + $0x10] sm:$0xff]
        %v329 = vld [vmem:[%s2 + $0x18] sm:$0xff]
        %v330 = vld [vmem:[%s3] sm:$0x1]
        %v332 = vlaneseq
        %v333 = vshrl.u32 %v332, 7
        %v334 = vsub.s32 0, %v333
        %v335 = vrot.slane %v330, %v334
        %vm337 = vcmask 261120
        %v339 = vsel %vm337, %v262, 0
        %v342 = vsel %vm337, %v263, 0
        %v345 = vsel %vm337, %v264, 0
        %v348 = vsel %vm337, %v265, 0
        %v351 = vsel %vm337, %v266, 0
        %v354 = vsel %vm337, %v267, 0
        %v357 = vsel %vm337, %v268, 0
        %v360 = vsel %vm337, %v269, 0
        %v363 = vsel %vm337, %v270, 0
        %v366 = vsel %vm337, %v271, 0
        %v369 = vsel %vm337, %v272, 0
        %v372 = vsel %vm337, %v273, 0
        %v375 = vsel %vm337, %v274, 0
        %v378 = vsel %vm337, %v275, 0
        %v381 = vsel %vm337, %v276, 0
        %v384 = vsel %vm337, %v277, 0
        %v387 = vsel %vm337, %v278, 0
        %v390 = vsel %vm337, %v279, 0
        %v393 = vsel %vm337, %v280, 0
        %v396 = vsel %vm337, %v281, 0
        %v399 = vsel %vm337, %v282, 0
        %v402 = vsel %vm337, %v283, 0
        %v405 = vsel %vm337, %v284, 0
        %v408 = vsel %vm337, %v285, 0
        %v411 = vsel %vm337, %v286, 0
        %v414 = vsel %vm337, %v287, 0
        %v417 = vsel %vm337, %v288, 0
        %v420 = vsel %vm337, %v289, 0
        %v423 = vsel %vm337, %v290, 0
        %v426 = vsel %vm337, %v291, 0
        %v429 = vsel %vm337, %v292, 0
        %v432 = vsel %vm337, %v293, 0
        %v435 = vsel %vm337, %v294, 0
        %v438 = vsel %vm337, %v295, 0
        %v441 = vsel %vm337, %v296, 0
        %v444 = vsel %vm337, %v297, 0
        %v447 = vsel %vm337, %v298, 0
        %v450 = vsel %vm337, %v299, 0
        %v453 = vsel %vm337, %v300, 0
        %v456 = vsel %vm337, %v301, 0
        %v459 = vsel %vm337, %v302, 0
        %v462 = vsel %vm337, %v303, 0
        %v465 = vsel %vm337, %v304, 0
        %v468 = vsel %vm337, %v305, 0
        %v471 = vsel %vm337, %v306, 0
        %v474 = vsel %vm337, %v307, 0
        %v477 = vsel %vm337, %v308, 0
        %v480 = vsel %vm337, %v309, 0
        %v483 = vsel %vm337, %v310, 0
        %v486 = vsel %vm337, %v311, 0
        %v489 = vsel %vm337, %v312, 0
        %v492 = vsel %vm337, %v313, 0
        %v495 = vsel %vm337, %v314, 0
        %v498 = vsel %vm337, %v315, 0
        %v501 = vsel %vm337, %v316, 0
        %v504 = vsel %vm337, %v317, 0
        %v507 = vsel %vm337, %v318, 0
        %v510 = vsel %vm337, %v319, 0
        %v513 = vsel %vm337, %v320, 0
        %v516 = vsel %vm337, %v321, 0
        %v519 = vsel %vm337, %v322, 0
        %v522 = vsel %vm337, %v323, 0
        %v525 = vsel %vm337, %v324, 0
        %v528 = vsel %vm337, %v325, 0
        %530 = vmatprep.subr.mxu0 0.0
        %531 = vmatpush1.msra.mxu0 %v326
        %532 = vmatprep.subr.mxu0 0.0
        %533 = vmatpush1.msra.mxu0 %v327
        %534 = vmatprep.subr.mxu0 0.0
        %535 = vmatpush1.msra.mxu0 %v328
        %536 = vmatprep.subr.mxu0 0.0
        %537 = vmatpush1.msra.mxu0 %v329
        %538 = vmatprep.subr.mxu0 0.0
        %539 = vmatpush1.msra.mxu0 0.0
        %540 = vmatprep.subr.mxu0 0.0
        %541 = vmatpush1.msra.mxu0 0.0
        %542 = vmatprep.subr.mxu0 0.0
        %543 = vmatpush1.msra.mxu0 0.0
        %544 = vmatprep.subr.mxu0 0.0
        %545 = vmatpush1.msra.mxu0 0.0
        %546 = vmatprep.subr.mxu0 0.0
        %547 = vmatpush1.msra.mxu0 0.0
        %548 = vmatprep.subr.mxu0 0.0
        %549 = vmatpush1.msra.mxu0 0.0
        %550 = vmatprep.subr.mxu0 0.0
        %551 = vmatpush1.msra.mxu0 0.0
        %552 = vmatprep.subr.mxu0 0.0
        %553 = vmatpush1.msra.mxu0 0.0
        %554 = vmatprep.subr.mxu0 0.0
        %555 = vmatpush1.msra.mxu0 0.0
        %556 = vmatprep.subr.mxu0 0.0
        %557 = vmatpush1.msra.mxu0 0.0
        %558 = vmatprep.subr.mxu0 0.0
        %559 = vmatpush1.msra.mxu0 0.0
        %560 = vmatprep.subr.mxu0 0.0
        %561 = vmatpush1.msra.mxu0 0.0
        %562 = vmatprep.subr.mxu0 0.0
        %563 = vmatpush1.msra.mxu0 0.0
        %564 = vmatprep.subr.mxu0 0.0
        %565 = vmatpush1.msra.mxu0 0.0
        %566 = vmatprep.subr.mxu0 0.0
        %567 = vmatpush1.msra.mxu0 0.0
        %568 = vmatprep.subr.mxu0 0.0
        %569 = vmatpush1.msra.mxu0 0.0
        %570 = vmatprep.subr.mxu0 0.0
        %571 = vmatpush1.msra.mxu0 0.0
        %572 = vmatprep.subr.mxu0 0.0
        %573 = vmatpush1.msra.mxu0 0.0
        %574 = vmatprep.subr.mxu0 0.0
        %575 = vmatpush1.msra.mxu0 0.0
        %576 = vmatprep.subr.mxu0 0.0
        %577 = vmatpush1.msra.mxu0 0.0
        %578 = vmatprep.subr.mxu0 0.0
        %579 = vmatpush1.msra.mxu0 0.0
        %580 = vmatprep.subr.mxu0 0.0
        %581 = vmatpush1.msra.mxu0 0.0
        %582 = vmatprep.subr.mxu0 0.0
        %583 = vmatpush1.msra.mxu0 0.0
        %584 = vmatprep.subr.mxu0 0.0
        %585 = vmatpush1.msra.mxu0 0.0
        %586 = vmatprep.subr.mxu0 0.0
        %587 = vmatpush1.msra.mxu0 0.0
        %588 = vmatprep.subr.mxu0 0.0
        %589 = vmatpush1.msra.mxu0 0.0
        %590 = vmatprep.subr.mxu0 0.0
        %591 = vmatpush1.msra.mxu0 0.0
        %592 = vmatprep.subr.mxu0 0.0
        %593 = vmatpush1.msra.mxu0 0.0
        %594 = vmatprep.mubr.f32.mxu0 0.0
        %595 = vmatmul.mubr.f32.gmra.mrb[0].mxu0 %v339
        %v596 = vpop.f32.mrb[0].mxu0
        %v597 = vadd.f32 %v335, %v596
        %v598 = vpop.f32.mrb[0].mxu0
        %599 = vmatprep.mubr.f32.mxu0 0.0
        %600 = vmatmul.mubr.f32.gmra.mrb[0].mxu0 %v342
        %v601 = vpop.f32.mrb[0].mxu0
        %v602 = vadd.f32 %v335, %v601
        %v603 = vpop.f32.mrb[0].mxu0
        %604 = vmatprep.mubr.f32.mxu0 0.0
        %605 = vmatmul.mubr.f32.gmra.mrb[0].mxu0 %v345
        %v606 = vpop.f32.mrb[0].mxu0
        %v607 = vadd.f32 %v335, %v606
        %v608 = vpop.f32.mrb[0].mxu0
        %609 = vmatprep.mubr.f32.mxu0 0.0
        %610 = vmatmul.mubr.f32.gmra.mrb[0].mxu0 %v348
        %v611 = vpop.f32.mrb[0].mxu0
        %v612 = vadd.f32 %v335, %v611
        %v613 = vpop.f32.mrb[0].mxu0
        %614 = vmatprep.mubr.f32.mxu0 0.0
        %615 = vmatmul.mubr.f32.gmra.mrb[0].mxu0 %v351
        %v616 = vpop.f32.mrb[0].mxu0
        %v617 = vadd.f32 %v335, %v616
        %v618 = vpop.f32.mrb[0].mxu0
        %619 = vmatprep.mubr.f32.mxu0 0.0
        %620 = vmatmul.mubr.f32.gmra.mrb[0].mxu0 %v354
        %v621 = vpop.f32.mrb[0].mxu0
        %v622 = vadd.f32 %v335, %v621
        %v623 = vpop.f32.mrb[0].mxu0
        %624 = vmatprep.mubr.f32.mxu0 0.0
        %625 = vmatmul.mubr.f32.gmra.mrb[0].mxu0 %v357
        %v626 = vpop.f32.mrb[0].mxu0
        %v627 = vadd.f32 %v335, %v626
        %v628 = vpop.f32.mrb[0].mxu0
        %629 = vmatprep.mubr.f32.mxu0 0.0
        %630 = vmatmul.mubr.f32.gmra.mrb[0].mxu0 %v360
        %v631 = vpop.f32.mrb[0].mxu0
        %v632 = vadd.f32 %v335, %v631
        %v633 = vpop.f32.mrb[0].mxu0
        %634 = vmatprep.mubr.f32.mxu0 0.0
        %635 = vmatmul.mubr.f32.gmra.mrb[0].mxu0 %v363
        %v636 = vpop.f32.mrb[0].mxu0
        %v637 = vadd.f32 %v335, %v636
        %v638 = vpop.f32.mrb[0].mxu0
        %639 = vmatprep.mubr.f32.mxu0 0.0
        %640 = vmatmul.mubr.f32.gmra.mrb[0].mxu0 %v366
        %v641 = vpop.f32.mrb[0].mxu0
        %v642 = vadd.f32 %v335, %v641
        %v643 = vpop.f32.mrb[0].mxu0
        %644 = vmatprep.mubr.f32.mxu0 0.0
        %645 = vmatmul.mubr.f32.gmra.mrb[0].mxu0 %v369
        %v646 = vpop.f32.mrb[0].mxu0
        %v647 = vadd.f32 %v335, %v646
        %v648 = vpop.f32.mrb[0].mxu0
        %649 = vmatprep.mubr.f32.mxu0 0.0
        %650 = vmatmul.mubr.f32.gmra.mrb[0].mxu0 %v372
        %v651 = vpop.f32.mrb[0].mxu0
        %v652 = vadd.f32 %v335, %v651
        %v653 = vpop.f32.mrb[0].mxu0
        %654 = vmatprep.mubr.f32.mxu0 0.0
        %655 = vmatmul.mubr.f32.gmra.mrb[0].mxu0 %v375
        %v656 = vpop.f32.mrb[0].mxu0
        %v657 = vadd.f32 %v335, %v656
        %v658 = vpop.f32.mrb[0].mxu0
        %659 = vmatprep.mubr.f32.mxu0 0.0
        %660 = vmatmul.mubr.f32.gmra.mrb[0].mxu0 %v378
        %v661 = vpop.f32.mrb[0].mxu0
        %v662 = vadd.f32 %v335, %v661
        %v663 = vpop.f32.mrb[0].mxu0
        %664 = vmatprep.mubr.f32.mxu0 0.0
        %665 = vmatmul.mubr.f32.gmra.mrb[0].mxu0 %v381
        %v666 = vpop.f32.mrb[0].mxu0
        %v667 = vadd.f32 %v335, %v666
        %v668 = vpop.f32.mrb[0].mxu0
        %669 = vmatprep.mubr.f32.mxu0 0.0
        %670 = vmatmul.mubr.f32.gmra.mrb[0].mxu0 %v384
        %v671 = vpop.f32.mrb[0].mxu0
        %v672 = vadd.f32 %v335, %v671
        %v673 = vpop.f32.mrb[0].mxu0
        %674 = vmatprep.mubr.f32.mxu0 0.0
        %675 = vmatmul.mubr.f32.gmra.mrb[0].mxu0 %v387
        %v676 = vpop.f32.mrb[0].mxu0
        %v677 = vadd.f32 %v335, %v676
        %v678 = vpop.f32.mrb[0].mxu0
        %679 = vmatprep.mubr.f32.mxu0 0.0
        %680 = vmatmul.mubr.f32.gmra.mrb[0].mxu0 %v390
        %v681 = vpop.f32.mrb[0].mxu0
        %v682 = vadd.f32 %v335, %v681
        %v683 = vpop.f32.mrb[0].mxu0
        %684 = vmatprep.mubr.f32.mxu0 0.0
        %685 = vmatmul.mubr.f32.gmra.mrb[0].mxu0 %v393
        %v686 = vpop.f32.mrb[0].mxu0
        %v687 = vadd.f32 %v335, %v686
        %v688 = vpop.f32.mrb[0].mxu0
        %689 = vmatprep.mubr.f32.mxu0 0.0
        %690 = vmatmul.mubr.f32.gmra.mrb[0].mxu0 %v396
        %v691 = vpop.f32.mrb[0].mxu0
        %v692 = vadd.f32 %v335, %v691
        %v693 = vpop.f32.mrb[0].mxu0
        %694 = vmatprep.mubr.f32.mxu0 0.0
        %695 = vmatmul.mubr.f32.gmra.mrb[0].mxu0 %v399
        %v696 = vpop.f32.mrb[0].mxu0
        %v697 = vadd.f32 %v335, %v696
        %v698 = vpop.f32.mrb[0].mxu0
        %699 = vmatprep.mubr.f32.mxu0 0.0
        %700 = vmatmul.mubr.f32.gmra.mrb[0].mxu0 %v402
        %v701 = vpop.f32.mrb[0].mxu0
        %v702 = vadd.f32 %v335, %v701
        %v703 = vpop.f32.mrb[0].mxu0
        %704 = vmatprep.mubr.f32.mxu0 0.0
        %705 = vmatmul.mubr.f32.gmra.mrb[0].mxu0 %v405
        %v706 = vpop.f32.mrb[0].mxu0
        %v707 = vadd.f32 %v335, %v706
        %v708 = vpop.f32.mrb[0].mxu0
        %709 = vmatprep.mubr.f32.mxu0 0.0
        %710 = vmatmul.mubr.f32.gmra.mrb[0].mxu0 %v408
        %v711 = vpop.f32.mrb[0].mxu0
        %v712 = vadd.f32 %v335, %v711
        %v713 = vpop.f32.mrb[0].mxu0
        %714 = vmatprep.mubr.f32.mxu0 0.0
        %715 = vmatmul.mubr.f32.gmra.mrb[0].mxu0 %v411
        %v716 = vpop.f32.mrb[0].mxu0
        %v717 = vadd.f32 %v335, %v716
        %v718 = vpop.f32.mrb[0].mxu0
        %719 = vmatprep.mubr.f32.mxu0 0.0
        %720 = vmatmul.mubr.f32.gmra.mrb[0].mxu0 %v414
        %v721 = vpop.f32.mrb[0].mxu0
        %v722 = vadd.f32 %v335, %v721
        %v723 = vpop.f32.mrb[0].mxu0
        %724 = vmatprep.mubr.f32.mxu0 0.0
        %725 = vmatmul.mubr.f32.gmra.mrb[0].mxu0 %v417
        %v726 = vpop.f32.mrb[0].mxu0
        %v727 = vadd.f32 %v335, %v726
        %v728 = vpop.f32.mrb[0].mxu0
        %729 = vmatprep.mubr.f32.mxu0 0.0
        %730 = vmatmul.mubr.f32.gmra.mrb[0].mxu0 %v420
        %v731 = vpop.f32.mrb[0].mxu0
        %v732 = vadd.f32 %v335, %v731
        %v733 = vpop.f32.mrb[0].mxu0
        %734 = vmatprep.mubr.f32.mxu0 0.0
        %735 = vmatmul.mubr.f32.gmra.mrb[0].mxu0 %v423
        %v736 = vpop.f32.mrb[0].mxu0
        %v737 = vadd.f32 %v335, %v736
        %v738 = vpop.f32.mrb[0].mxu0
        %739 = vmatprep.mubr.f32.mxu0 0.0
        %740 = vmatmul.mubr.f32.gmra.mrb[0].mxu0 %v426
        %v741 = vpop.f32.mrb[0].mxu0
        %v742 = vadd.f32 %v335, %v741
        %v743 = vpop.f32.mrb[0].mxu0
        %744 = vmatprep.mubr.f32.mxu0 0.0
        %745 = vmatmul.mubr.f32.gmra.mrb[0].mxu0 %v429
        %v746 = vpop.f32.mrb[0].mxu0
        %v747 = vadd.f32 %v335, %v746
        %v748 = vpop.f32.mrb[0].mxu0
        %749 = vmatprep.mubr.f32.mxu0 0.0
        %750 = vmatmul.mubr.f32.gmra.mrb[0].mxu0 %v432
        %v751 = vpop.f32.mrb[0].mxu0
        %v752 = vadd.f32 %v335, %v751
        %v753 = vpop.f32.mrb[0].mxu0
        %754 = vmatprep.mubr.f32.mxu0 0.0
        %755 = vmatmul.mubr.f32.gmra.mrb[0].mxu0 %v435
        %v756 = vpop.f32.mrb[0].mxu0
        %v757 = vadd.f32 %v335, %v756
        %v758 = vpop.f32.mrb[0].mxu0
        %759 = vmatprep.mubr.f32.mxu0 0.0
        %760 = vmatmul.mubr.f32.gmra.mrb[0].mxu0 %v438
        %v761 = vpop.f32.mrb[0].mxu0
        %v762 = vadd.f32 %v335, %v761
        %v763 = vpop.f32.mrb[0].mxu0
        %764 = vmatprep.mubr.f32.mxu0 0.0
        %765 = vmatmul.mubr.f32.gmra.mrb[0].mxu0 %v441
        %v766 = vpop.f32.mrb[0].mxu0
        %v767 = vadd.f32 %v335, %v766
        %v768 = vpop.f32.mrb[0].mxu0
        %769 = vmatprep.mubr.f32.mxu0 0.0
        %770 = vmatmul.mubr.f32.gmra.mrb[0].mxu0 %v444
        %v771 = vpop.f32.mrb[0].mxu0
        %v772 = vadd.f32 %v335, %v771
        %v773 = vpop.f32.mrb[0].mxu0
        %774 = vmatprep.mubr.f32.mxu0 0.0
        %775 = vmatmul.mubr.f32.gmra.mrb[0].mxu0 %v447
        %v776 = vpop.f32.mrb[0].mxu0
        %v777 = vadd.f32 %v335, %v776
        %v778 = vpop.f32.mrb[0].mxu0
        %779 = vmatprep.mubr.f32.mxu0 0.0
        %780 = vmatmul.mubr.f32.gmra.mrb[0].mxu0 %v450
        %v781 = vpop.f32.mrb[0].mxu0
        %v782 = vadd.f32 %v335, %v781
        %v783 = vpop.f32.mrb[0].mxu0
        %784 = vmatprep.mubr.f32.mxu0 0.0
        %785 = vmatmul.mubr.f32.gmra.mrb[0].mxu0 %v453
        %v786 = vpop.f32.mrb[0].mxu0
        %v787 = vadd.f32 %v335, %v786
        %v788 = vpop.f32.mrb[0].mxu0
        %789 = vmatprep.mubr.f32.mxu0 0.0
        %790 = vmatmul.mubr.f32.gmra.mrb[0].mxu0 %v456
        %v791 = vpop.f32.mrb[0].mxu0
        %v792 = vadd.f32 %v335, %v791
        %v793 = vpop.f32.mrb[0].mxu0
        %794 = vmatprep.mubr.f32.mxu0 0.0
        %795 = vmatmul.mubr.f32.gmra.mrb[0].mxu0 %v459
        %v796 = vpop.f32.mrb[0].mxu0
        %v797 = vadd.f32 %v335, %v796
        %v798 = vpop.f32.mrb[0].mxu0
        %799 = vmatprep.mubr.f32.mxu0 0.0
        %800 = vmatmul.mubr.f32.gmra.mrb[0].mxu0 %v462
        %v801 = vpop.f32.mrb[0].mxu0
        %v802 = vadd.f32 %v335, %v801
        %v803 = vpop.f32.mrb[0].mxu0
        %804 = vmatprep.mubr.f32.mxu0 0.0
        %805 = vmatmul.mubr.f32.gmra.mrb[0].mxu0 %v465
        %v806 = vpop.f32.mrb[0].mxu0
        %v807 = vadd.f32 %v335, %v806
        %v808 = vpop.f32.mrb[0].mxu0
        %809 = vmatprep.mubr.f32.mxu0 0.0
        %810 = vmatmul.mubr.f32.gmra.mrb[0].mxu0 %v468
        %v811 = vpop.f32.mrb[0].mxu0
        %v812 = vadd.f32 %v335, %v811
        %v813 = vpop.f32.mrb[0].mxu0
        %814 = vmatprep.mubr.f32.mxu0 0.0
        %815 = vmatmul.mubr.f32.gmra.mrb[0].mxu0 %v471
        %v816 = vpop.f32.mrb[0].mxu0
        %v817 = vadd.f32 %v335, %v816
        %v818 = vpop.f32.mrb[0].mxu0
        %819 = vmatprep.mubr.f32.mxu0 0.0
        %820 = vmatmul.mubr.f32.gmra.mrb[0].mxu0 %v474
        %v821 = vpop.f32.mrb[0].mxu0
        %v822 = vadd.f32 %v335, %v821
        %v823 = vpop.f32.mrb[0].mxu0
        %824 = vmatprep.mubr.f32.mxu0 0.0
        %825 = vmatmul.mubr.f32.gmra.mrb[0].mxu0 %v477
        %v826 = vpop.f32.mrb[0].mxu0
        %v827 = vadd.f32 %v335, %v826
        %v828 = vpop.f32.mrb[0].mxu0
        %829 = vmatprep.mubr.f32.mxu0 0.0
        %830 = vmatmul.mubr.f32.gmra.mrb[0].mxu0 %v480
        %v831 = vpop.f32.mrb[0].mxu0
        %v832 = vadd.f32 %v335, %v831
        %v833 = vpop.f32.mrb[0].mxu0
        %834 = vmatprep.mubr.f32.mxu0 0.0
        %835 = vmatmul.mubr.f32.gmra.mrb[0].mxu0 %v483
        %v836 = vpop.f32.mrb[0].mxu0
        %v837 = vadd.f32 %v335, %v836
        %v838 = vpop.f32.mrb[0].mxu0
        %839 = vmatprep.mubr.f32.mxu0 0.0
        %840 = vmatmul.mubr.f32.gmra.mrb[0].mxu0 %v486
        %v841 = vpop.f32.mrb[0].mxu0
        %v842 = vadd.f32 %v335, %v841
        %v843 = vpop.f32.mrb[0].mxu0
        %844 = vmatprep.mubr.f32.mxu0 0.0
        %845 = vmatmul.mubr.f32.gmra.mrb[0].mxu0 %v489
        %v846 = vpop.f32.mrb[0].mxu0
        %v847 = vadd.f32 %v335, %v846
        %v848 = vpop.f32.mrb[0].mxu0
        %849 = vmatprep.mubr.f32.mxu0 0.0
        %850 = vmatmul.mubr.f32.gmra.mrb[0].mxu0 %v492
        %v851 = vpop.f32.mrb[0].mxu0
        %v852 = vadd.f32 %v335, %v851
        %v853 = vpop.f32.mrb[0].mxu0
        %854 = vmatprep.mubr.f32.mxu0 0.0
        %855 = vmatmul.mubr.f32.gmra.mrb[0].mxu0 %v495
        %v856 = vpop.f32.mrb[0].mxu0
        %v857 = vadd.f32 %v335, %v856
        %v858 = vpop.f32.mrb[0].mxu0
        %859 = vmatprep.mubr.f32.mxu0 0.0
        %860 = vmatmul.mubr.f32.gmra.mrb[0].mxu0 %v498
        %v861 = vpop.f32.mrb[0].mxu0
        %v862 = vadd.f32 %v335, %v861
        %v863 = vpop.f32.mrb[0].mxu0
        %864 = vmatprep.mubr.f32.mxu0 0.0
        %865 = vmatmul.mubr.f32.gmra.mrb[0].mxu0 %v501
        %v866 = vpop.f32.mrb[0].mxu0
        %v867 = vadd.f32 %v335, %v866
        %v868 = vpop.f32.mrb[0].mxu0
        %869 = vmatprep.mubr.f32.mxu0 0.0
        %870 = vmatmul.mubr.f32.gmra.mrb[0].mxu0 %v504
        %v871 = vpop.f32.mrb[0].mxu0
        %v872 = vadd.f32 %v335, %v871
        %v873 = vpop.f32.mrb[0].mxu0
        %874 = vmatprep.mubr.f32.mxu0 0.0
        %875 = vmatmul.mubr.f32.gmra.mrb[0].mxu0 %v507
        %v876 = vpop.f32.mrb[0].mxu0
        %v877 = vadd.f32 %v335, %v876
        %v878 = vpop.f32.mrb[0].mxu0
        %879 = vmatprep.mubr.f32.mxu0 0.0
        %880 = vmatmul.mubr.f32.gmra.mrb[0].mxu0 %v510
        %v881 = vpop.f32.mrb[0].mxu0
        %v882 = vadd.f32 %v335, %v881
        %v883 = vpop.f32.mrb[0].mxu0
        %884 = vmatprep.mubr.f32.mxu0 0.0
        %885 = vmatmul.mubr.f32.gmra.mrb[0].mxu0 %v513
        %v886 = vpop.f32.mrb[0].mxu0
        %v887 = vadd.f32 %v335, %v886
        %v888 = vpop.f32.mrb[0].mxu0
        %889 = vmatprep.mubr.f32.mxu0 0.0
        %890 = vmatmul.mubr.f32.gmra.mrb[0].mxu0 %v516
        %v891 = vpop.f32.mrb[0].mxu0
        %v892 = vadd.f32 %v335, %v891
        %v893 = vpop.f32.mrb[0].mxu0
        %894 = vmatprep.mubr.f32.mxu0 0.0
        %895 = vmatmul.mubr.f32.gmra.mrb[0].mxu0 %v519
        %v896 = vpop.f32.mrb[0].mxu0
        %v897 = vadd.f32 %v335, %v896
        %v898 = vpop.f32.mrb[0].mxu0
        %899 = vmatprep.mubr.f32.mxu0 0.0
        %900 = vmatmul.mubr.f32.gmra.mrb[0].mxu0 %v522
        %v901 = vpop.f32.mrb[0].mxu0
        %v902 = vadd.f32 %v335, %v901
        %v903 = vpop.f32.mrb[0].mxu0
        %904 = vmatprep.mubr.f32.mxu0 0.0
        %905 = vmatmul.mubr.f32.gmra.mrb[0].mxu0 %v525
        %v906 = vpop.f32.mrb[0].mxu0
        %v907 = vadd.f32 %v335, %v906
        %v908 = vpop.f32.mrb[0].mxu0
        %909 = vmatprep.mubr.f32.mxu0 0.0
        %910 = vmatmul.mubr.f32.gmra.mrb[0].mxu0 %v528
        %v911 = vpop.f32.mrb[0].mxu0
        %v912 = vadd.f32 %v335, %v911
        %v913 = vpop.f32.mrb[0].mxu0
        %914 = vdwg.mxu0
        %vm915 = vcmask 64512
        %916 = vst.msk [vmem:[%s259] sm:$0xff] %vm915, %v597
        %917 = vst.msk [vmem:[%s259 + $0x8] sm:$0xff] %vm915, %v602
        %918 = vst.msk [vmem:[%s259 + $0x10] sm:$0xff] %vm915, %v607
        %919 = vst.msk [vmem:[%s259 + $0x18] sm:$0xff] %vm915, %v612
        %920 = vst.msk [vmem:[%s259 + $0x20] sm:$0xff] %vm915, %v617
        %921 = vst.msk [vmem:[%s259 + $0x28] sm:$0xff] %vm915, %v622
        %922 = vst.msk [vmem:[%s259 + $0x30] sm:$0xff] %vm915, %v627
        %923 = vst.msk [vmem:[%s259 + $0x38] sm:$0xff] %vm915, %v632
        %924 = vst.msk [vmem:[%s259 + $0x40] sm:$0xff] %vm915, %v637
        %925 = vst.msk [vmem:[%s259 + $0x48] sm:$0xff] %vm915, %v642
        %926 = vst.msk [vmem:[%s259 + $0x50] sm:$0xff] %vm915, %v647
        %927 = vst.msk [vmem:[%s259 + $0x58] sm:$0xff] %vm915, %v652
        %928 = vst.msk [vmem:[%s259 + $0x60] sm:$0xff] %vm915, %v657
        %929 = vst.msk [vmem:[%s259 + $0x68] sm:$0xff] %vm915, %v662
        %930 = vst.msk [vmem:[%s259 + $0x70] sm:$0xff] %vm915, %v667
        %931 = vst.msk [vmem:[%s259 + $0x78] sm:$0xff] %vm915, %v672
        %932 = vst.msk [vmem:[%s259 + $0x80] sm:$0xff] %vm915, %v677
        %933 = vst.msk [vmem:[%s259 + $0x88] sm:$0xff] %vm915, %v682
        %934 = vst.msk [vmem:[%s259 + $0x90] sm:$0xff] %vm915, %v687
        %935 = vst.msk [vmem:[%s259 + $0x98] sm:$0xff] %vm915, %v692
        %936 = vst.msk [vmem:[%s259 + $0xa0] sm:$0xff] %vm915, %v697
        %937 = vst.msk [vmem:[%s259 + $0xa8] sm:$0xff] %vm915, %v702
        %938 = vst.msk [vmem:[%s259 + $0xb0] sm:$0xff] %vm915, %v707
        %939 = vst.msk [vmem:[%s259 + $0xb8] sm:$0xff] %vm915, %v712
        %940 = vst.msk [vmem:[%s259 + $0xc0] sm:$0xff] %vm915, %v717
        %941 = vst.msk [vmem:[%s259 + $0xc8] sm:$0xff] %vm915, %v722
        %942 = vst.msk [vmem:[%s259 + $0xd0] sm:$0xff] %vm915, %v727
        %943 = vst.msk [vmem:[%s259 + $0xd8] sm:$0xff] %vm915, %v732
        %944 = vst.msk [vmem:[%s259 + $0xe0] sm:$0xff] %vm915, %v737
        %945 = vst.msk [vmem:[%s259 + $0xe8] sm:$0xff] %vm915, %v742
        %946 = vst.msk [vmem:[%s259 + $0xf0] sm:$0xff] %vm915, %v747
        %947 = vst.msk [vmem:[%s259 + $0xf8] sm:$0xff] %vm915, %v752
        %948 = vst.msk [vmem:[%s259 + $0x100] sm:$0xff] %vm915, %v757
        %949 = vst.msk [vmem:[%s259 + $0x108] sm:$0xff] %vm915, %v762
        %950 = vst.msk [vmem:[%s259 + $0x110] sm:$0xff] %vm915, %v767
        %951 = vst.msk [vmem:[%s259 + $0x118] sm:$0xff] %vm915, %v772
        %952 = vst.msk [vmem:[%s259 + $0x120] sm:$0xff] %vm915, %v777
        %953 = vst.msk [vmem:[%s259 + $0x128] sm:$0xff] %vm915, %v782
        %954 = vst.msk [vmem:[%s259 + $0x130] sm:$0xff] %vm915, %v787
        %955 = vst.msk [vmem:[%s259 + $0x138] sm:$0xff] %vm915, %v792
        %956 = vst.msk [vmem:[%s259 + $0x140] sm:$0xff] %vm915, %v797
        %957 = vst.msk [vmem:[%s259 + $0x148] sm:$0xff] %vm915, %v802
        %958 = vst.msk [vmem:[%s259 + $0x150] sm:$0xff] %vm915, %v807
        %959 = vst.msk [vmem:[%s259 + $0x158] sm:$0xff] %vm915, %v812
        %960 = vst.msk [vmem:[%s259 + $0x160] sm:$0xff] %vm915, %v817
        %961 = vst.msk [vmem:[%s259 + $0x168] sm:$0xff] %vm915, %v822
        %962 = vst.msk [vmem:[%s259 + $0x170] sm:$0xff] %vm915, %v827
        %963 = vst.msk [vmem:[%s259 + $0x178] sm:$0xff] %vm915, %v832
        %964 = vst.msk [vmem:[%s259 + $0x180] sm:$0xff] %vm915, %v837
        %965 = vst.msk [vmem:[%s259 + $0x188] sm:$0xff] %vm915, %v842
        %966 = vst.msk [vmem:[%s259 + $0x190] sm:$0xff] %vm915, %v847
        %967 = vst.msk [vmem:[%s259 + $0x198] sm:$0xff] %vm915, %v852
        %968 = vst.msk [vmem:[%s259 + $0x1a0] sm:$0xff] %vm915, %v857
        %969 = vst.msk [vmem:[%s259 + $0x1a8] sm:$0xff] %vm915, %v862
        %970 = vst.msk [vmem:[%s259 + $0x1b0] sm:$0xff] %vm915, %v867
        %971 = vst.msk [vmem:[%s259 + $0x1b8] sm:$0xff] %vm915, %v872
        %972 = vst.msk [vmem:[%s259 + $0x1c0] sm:$0xff] %vm915, %v877
        %973 = vst.msk [vmem:[%s259 + $0x1c8] sm:$0xff] %vm915, %v882
        %974 = vst.msk [vmem:[%s259 + $0x1d0] sm:$0xff] %vm915, %v887
        %975 = vst.msk [vmem:[%s259 + $0x1d8] sm:$0xff] %vm915, %v892
        %976 = vst.msk [vmem:[%s259 + $0x1e0] sm:$0xff] %vm915, %v897
        %977 = vst.msk [vmem:[%s259 + $0x1e8] sm:$0xff] %vm915, %v902
        %978 = vst.msk [vmem:[%s259 + $0x1f0] sm:$0xff] %vm915, %v907
        %979 = vst.msk [vmem:[%s259 + $0x1f8] sm:$0xff] %vm915, %v912
        %v980 = vld [vmem:[%s253] sm:$0xff]
        %v981 = vld [vmem:[%s253 + $0x8] sm:$0xff]
        %v982 = vld [vmem:[%s253 + $0x10] sm:$0xff]
        %v983 = vld [vmem:[%s253 + $0x18] sm:$0xff]
        %v984 = vld [vmem:[%s253 + $0x20] sm:$0xff]
        %v985 = vld [vmem:[%s253 + $0x28] sm:$0xff]
        %v986 = vld [vmem:[%s253 + $0x30] sm:$0xff]
        %v987 = vld [vmem:[%s253 + $0x38] sm:$0xff]
        %v988 = vld [vmem:[%s253 + $0x40] sm:$0xff]
        %v989 = vld [vmem:[%s253 + $0x48] sm:$0xff]
        %v990 = vld [vmem:[%s253 + $0x50] sm:$0xff]
        %v991 = vld [vmem:[%s253 + $0x58] sm:$0xff]
        %v992 = vld [vmem:[%s253 + $0x60] sm:$0xff]
        %v993 = vld [vmem:[%s253 + $0x68] sm:$0xff]
        %v994 = vld [vmem:[%s253 + $0x70] sm:$0xff]
        %v995 = vld [vmem:[%s253 + $0x78] sm:$0xff]
        %v996 = vld [vmem:[%s253 + $0x80] sm:$0xff]
        %v997 = vld [vmem:[%s253 + $0x88] sm:$0xff]
        %v998 = vld [vmem:[%s253 + $0x90] sm:$0xff]
        %v999 = vld [vmem:[%s253 + $0x98] sm:$0xff]
        %v1000 = vld [vmem:[%s253 + $0xa0] sm:$0xff]
        %v1001 = vld [vmem:[%s253 + $0xa8] sm:$0xff]
        %v1002 = vld [vmem:[%s253 + $0xb0] sm:$0xff]
        %v1003 = vld [vmem:[%s253 + $0xb8] sm:$0xff]
        %v1004 = vld [vmem:[%s253 + $0xc0] sm:$0xff]
        %v1005 = vld [vmem:[%s253 + $0xc8] sm:$0xff]
        %v1006 = vld [vmem:[%s253 + $0xd0] sm:$0xff]
        %v1007 = vld [vmem:[%s253 + $0xd8] sm:$0xff]
        %v1008 = vld [vmem:[%s253 + $0xe0] sm:$0xff]
        %v1009 = vld [vmem:[%s253 + $0xe8] sm:$0xff]
        %v1010 = vld [vmem:[%s253 + $0xf0] sm:$0xff]
        %v1011 = vld [vmem:[%s253 + $0xf8] sm:$0xff]
        %v1012 = vld [vmem:[%s253 + $0x100] sm:$0xff]
        %v1013 = vld [vmem:[%s253 + $0x108] sm:$0xff]
        %v1014 = vld [vmem:[%s253 + $0x110] sm:$0xff]
        %v1015 = vld [vmem:[%s253 + $0x118] sm:$0xff]
        %v1016 = vld [vmem:[%s253 + $0x120] sm:$0xff]
        %v1017 = vld [vmem:[%s253 + $0x128] sm:$0xff]
        %v1018 = vld [vmem:[%s253 + $0x130] sm:$0xff]
        %v1019 = vld [vmem:[%s253 + $0x138] sm:$0xff]
        %v1020 = vld [vmem:[%s253 + $0x140] sm:$0xff]
        %v1021 = vld [vmem:[%s253 + $0x148] sm:$0xff]
        %v1022 = vld [vmem:[%s253 + $0x150] sm:$0xff]
        %v1023 = vld [vmem:[%s253 + $0x158] sm:$0xff]
        %v1024 = vld [vmem:[%s253 + $0x160] sm:$0xff]
        %v1025 = vld [vmem:[%s253 + $0x168] sm:$0xff]
        %v1026 = vld [vmem:[%s253 + $0x170] sm:$0xff]
        %v1027 = vld [vmem:[%s253 + $0x178] sm:$0xff]
        %v1028 = vld [vmem:[%s253 + $0x180] sm:$0xff]
        %v1029 = vld [vmem:[%s253 + $0x188] sm:$0xff]
        %v1030 = vld [vmem:[%s253 + $0x190] sm:$0xff]
        %v1031 = vld [vmem:[%s253 + $0x198] sm:$0xff]
        %v1032 = vld [vmem:[%s253 + $0x1a0] sm:$0xff]
        %v1033 = vld [vmem:[%s253 + $0x1a8] sm:$0xff]
        %v1034 = vld [vmem:[%s253 + $0x1b0] sm:$0xff]
        %v1035 = vld [vmem:[%s253 + $0x1b8] sm:$0xff]
        %v1036 = vld [vmem:[%s253 + $0x1c0] sm:$0xff]
        %v1037 = vld [vmem:[%s253 + $0x1c8] sm:$0xff]
        %v1038 = vld [vmem:[%s253 + $0x1d0] sm:$0xff]
        %v1039 = vld [vmem:[%s253 + $0x1d8] sm:$0xff]
        %v1040 = vld [vmem:[%s253 + $0x1e0] sm:$0xff]
        %v1041 = vld [vmem:[%s253 + $0x1e8] sm:$0xff]
        %v1042 = vld [vmem:[%s253 + $0x1f0] sm:$0xff]
        %v1043 = vld [vmem:[%s253 + $0x1f8] sm:$0xff]
        %v1044 = vmul.f32 %v597, %v980
        %v1045 = vmul.f32 %v602, %v981
        %v1046 = vmul.f32 %v607, %v982
        %v1047 = vmul.f32 %v612, %v983
        %v1048 = vmul.f32 %v617, %v984
        %v1049 = vmul.f32 %v622, %v985
        %v1050 = vmul.f32 %v627, %v986
        %v1051 = vmul.f32 %v632, %v987
        %v1052 = vmul.f32 %v637, %v988
        %v1053 = vmul.f32 %v642, %v989
        %v1054 = vmul.f32 %v647, %v990
        %v1055 = vmul.f32 %v652, %v991
        %v1056 = vmul.f32 %v657, %v992
        %v1057 = vmul.f32 %v662, %v993
        %v1058 = vmul.f32 %v667, %v994
        %v1059 = vmul.f32 %v672, %v995
        %v1060 = vmul.f32 %v677, %v996
        %v1061 = vmul.f32 %v682, %v997
        %v1062 = vmul.f32 %v687, %v998
        %v1063 = vmul.f32 %v692, %v999
        %v1064 = vmul.f32 %v697, %v1000
        %v1065 = vmul.f32 %v702, %v1001
        %v1066 = vmul.f32 %v707, %v1002
        %v1067 = vmul.f32 %v712, %v1003
        %v1068 = vmul.f32 %v717, %v1004
        %v1069 = vmul.f32 %v722, %v1005
        %v1070 = vmul.f32 %v727, %v1006
        %v1071 = vmul.f32 %v732, %v1007
        %v1072 = vmul.f32 %v737, %v1008
        %v1073 = vmul.f32 %v742, %v1009
        %v1074 = vmul.f32 %v747, %v1010
        %v1075 = vmul.f32 %v752, %v1011
        %v1076 = vmul.f32 %v757, %v1012
        %v1077 = vmul.f32 %v762, %v1013
        %v1078 = vmul.f32 %v767, %v1014
        %v1079 = vmul.f32 %v772, %v1015
        %v1080 = vmul.f32 %v777, %v1016
        %v1081 = vmul.f32 %v782, %v1017
        %v1082 = vmul.f32 %v787, %v1018
        %v1083 = vmul.f32 %v792, %v1019
        %v1084 = vmul.f32 %v797, %v1020
        %v1085 = vmul.f32 %v802, %v1021
        %v1086 = vmul.f32 %v807, %v1022
        %v1087 = vmul.f32 %v812, %v1023
        %v1088 = vmul.f32 %v817, %v1024
        %v1089 = vmul.f32 %v822, %v1025
        %v1090 = vmul.f32 %v827, %v1026
        %v1091 = vmul.f32 %v832, %v1027
        %v1092 = vmul.f32 %v837, %v1028
        %v1093 = vmul.f32 %v842, %v1029
        %v1094 = vmul.f32 %v847, %v1030
        %v1095 = vmul.f32 %v852, %v1031
        %v1096 = vmul.f32 %v857, %v1032
        %v1097 = vmul.f32 %v862, %v1033
        %v1098 = vmul.f32 %v867, %v1034
        %v1099 = vmul.f32 %v872, %v1035
        %v1100 = vmul.f32 %v877, %v1036
        %v1101 = vmul.f32 %v882, %v1037
        %v1102 = vmul.f32 %v887, %v1038
        %v1103 = vmul.f32 %v892, %v1039
        %v1104 = vmul.f32 %v897, %v1040
        %v1105 = vmul.f32 %v902, %v1041
        %v1106 = vmul.f32 %v907, %v1042
        %v1107 = vmul.f32 %v912, %v1043
        %v1109 = vsel %vm915, 1.0, 0
        %v1112 = vsel %vm915, %v1044, 0
        %v1115 = vsel %vm915, %v1045, 0
        %v1118 = vsel %vm915, %v1046, 0
        %v1121 = vsel %vm915, %v1047, 0
        %v1124 = vsel %vm915, %v1048, 0
        %v1127 = vsel %vm915, %v1049, 0
        %v1130 = vsel %vm915, %v1050, 0
        %v1133 = vsel %vm915, %v1051, 0
        %v1136 = vsel %vm915, %v1052, 0
        %v1139 = vsel %vm915, %v1053, 0
        %v1142 = vsel %vm915, %v1054, 0
        %v1145 = vsel %vm915, %v1055, 0
        %v1148 = vsel %vm915, %v1056, 0
        %v1151 = vsel %vm915, %v1057, 0
        %v1154 = vsel %vm915, %v1058, 0
        %v1157 = vsel %vm915, %v1059, 0
        %v1160 = vsel %vm915, %v1060, 0
        %v1163 = vsel %vm915, %v1061, 0
        %v1166 = vsel %vm915, %v1062, 0
        %v1169 = vsel %vm915, %v1063, 0
        %v1172 = vsel %vm915, %v1064, 0
        %v1175 = vsel %vm915, %v1065, 0
        %v1178 = vsel %vm915, %v1066, 0
        %v1181 = vsel %vm915, %v1067, 0
        %v1184 = vsel %vm915, %v1068, 0
        %v1187 = vsel %vm915, %v1069, 0
        %v1190 = vsel %vm915, %v1070, 0
        %v1193 = vsel %vm915, %v1071, 0
        %v1196 = vsel %vm915, %v1072, 0
        %v1199 = vsel %vm915, %v1073, 0
        %v1202 = vsel %vm915, %v1074, 0
        %v1205 = vsel %vm915, %v1075, 0
        %v1208 = vsel %vm915, %v1076, 0
        %v1211 = vsel %vm915, %v1077, 0
        %v1214 = vsel %vm915, %v1078, 0
        %v1217 = vsel %vm915, %v1079, 0
        %v1220 = vsel %vm915, %v1080, 0
        %v1223 = vsel %vm915, %v1081, 0
        %v1226 = vsel %vm915, %v1082, 0
        %v1229 = vsel %vm915, %v1083, 0
        %v1232 = vsel %vm915, %v1084, 0
        %v1235 = vsel %vm915, %v1085, 0
        %v1238 = vsel %vm915, %v1086, 0
        %v1241 = vsel %vm915, %v1087, 0
        %v1244 = vsel %vm915, %v1088, 0
        %v1247 = vsel %vm915, %v1089, 0
        %v1250 = vsel %vm915, %v1090, 0
        %v1253 = vsel %vm915, %v1091, 0
        %v1256 = vsel %vm915, %v1092, 0
        %v1259 = vsel %vm915, %v1093, 0
        %v1262 = vsel %vm915, %v1094, 0
        %v1265 = vsel %vm915, %v1095, 0
        %v1268 = vsel %vm915, %v1096, 0
        %v1271 = vsel %vm915, %v1097, 0
        %v1274 = vsel %vm915, %v1098, 0
        %v1277 = vsel %vm915, %v1099, 0
        %v1280 = vsel %vm915, %v1100, 0
        %v1283 = vsel %vm915, %v1101, 0
        %v1286 = vsel %vm915, %v1102, 0
        %v1289 = vsel %vm915, %v1103, 0
        %v1292 = vsel %vm915, %v1104, 0
        %v1295 = vsel %vm915, %v1105, 0
        %v1298 = vsel %vm915, %v1106, 0
        %v1301 = vsel %vm915, %v1107, 0
        %1303 = vmatprep.subr.mxu0 0.0
        %1304 = vmatpush1.xpose.msra.mxu0 %v1112
        %1305 = vmatprep.subr.mxu0 0.0
        %1306 = vmatpush1.xpose.msra.mxu0 %v1115
        %1307 = vmatprep.subr.mxu0 0.0
        %1308 = vmatpush1.xpose.msra.mxu0 %v1118
        %1309 = vmatprep.subr.mxu0 0.0
        %1310 = vmatpush1.xpose.msra.mxu0 %v1121
        %1311 = vmatprep.subr.mxu0 0.0
        %1312 = vmatpush1.xpose.msra.mxu0 %v1124
        %1313 = vmatprep.subr.mxu0 0.0
        %1314 = vmatpush1.xpose.msra.mxu0 %v1127
        %1315 = vmatprep.subr.mxu0 0.0
        %1316 = vmatpush1.xpose.msra.mxu0 %v1130
        %1317 = vmatprep.subr.mxu0 0.0
        %1318 = vmatpush1.xpose.msra.mxu0 %v1133
        %1319 = vmatprep.subr.mxu0 0.0
        %1320 = vmatpush1.xpose.msra.mxu0 %v1136
        %1321 = vmatprep.subr.mxu0 0.0
        %1322 = vmatpush1.xpose.msra.mxu0 %v1139
        %1323 = vmatprep.subr.mxu0 0.0
        %1324 = vmatpush1.xpose.msra.mxu0 %v1142
        %1325 = vmatprep.subr.mxu0 0.0
        %1326 = vmatpush1.xpose.msra.mxu0 %v1145
        %1327 = vmatprep.subr.mxu0 0.0
        %1328 = vmatpush1.xpose.msra.mxu0 %v1148
        %1329 = vmatprep.subr.mxu0 0.0
        %1330 = vmatpush1.xpose.msra.mxu0 %v1151
        %1331 = vmatprep.subr.mxu0 0.0
        %1332 = vmatpush1.xpose.msra.mxu0 %v1154
        %1333 = vmatprep.subr.mxu0 0.0
        %1334 = vmatpush1.xpose.msra.mxu0 %v1157
        %1335 = vmatprep.subr.mxu0 0.0
        %1336 = vmatpush1.xpose.msra.mxu0 %v1160
        %1337 = vmatprep.subr.mxu0 0.0
        %1338 = vmatpush1.xpose.msra.mxu0 %v1163
        %1339 = vmatprep.subr.mxu0 0.0
        %1340 = vmatpush1.xpose.msra.mxu0 %v1166
        %1341 = vmatprep.subr.mxu0 0.0
        %1342 = vmatpush1.xpose.msra.mxu0 %v1169
        %1343 = vmatprep.subr.mxu0 0.0
        %1344 = vmatpush1.xpose.msra.mxu0 %v1172
        %1345 = vmatprep.subr.mxu0 0.0
        %1346 = vmatpush1.xpose.msra.mxu0 %v1175
        %1347 = vmatprep.subr.mxu0 0.0
        %1348 = vmatpush1.xpose.msra.mxu0 %v1178
        %1349 = vmatprep.subr.mxu0 0.0
        %1350 = vmatpush1.xpose.msra.mxu0 %v1181
        %1351 = vmatprep.subr.mxu0 0.0
        %1352 = vmatpush1.xpose.msra.mxu0 %v1184
        %1353 = vmatprep.subr.mxu0 0.0
        %1354 = vmatpush1.xpose.msra.mxu0 %v1187
        %1355 = vmatprep.subr.mxu0 0.0
        %1356 = vmatpush1.xpose.msra.mxu0 %v1190
        %1357 = vmatprep.subr.mxu0 0.0
        %1358 = vmatpush1.xpose.msra.mxu0 %v1193
        %1359 = vmatprep.subr.mxu0 0.0
        %1360 = vmatpush1.xpose.msra.mxu0 %v1196
        %1361 = vmatprep.subr.mxu0 0.0
        %1362 = vmatpush1.xpose.msra.mxu0 %v1199
        %1363 = vmatprep.subr.mxu0 0.0
        %1364 = vmatpush1.xpose.msra.mxu0 %v1202
        %1365 = vmatprep.subr.mxu0 0.0
        %1366 = vmatpush1.xpose.msra.mxu0 %v1205
        %1367 = vmatprep.mubr.f32.mxu0 0.0
        %1368 = vmatmul.mubr.f32.gmra.mrb[0].mxu0 %v1109
        %v1369 = vpop.f32.mrb[0].mxu0
        %v1370 = vadd.f32 0.0, %v1369
        %v1371 = vpop.f32.mrb[0].mxu0
        %v1372 = vadd.f32 0.0, %v1371
        %1373 = vdwg.mxu0
        %1374 = vmatprep.subr.mxu0 0.0
        %1375 = vmatpush1.xpose.msra.mxu0 %v1208
        %1376 = vmatprep.subr.mxu0 0.0
        %1377 = vmatpush1.xpose.msra.mxu0 %v1211
        %1378 = vmatprep.subr.mxu0 0.0
        %1379 = vmatpush1.xpose.msra.mxu0 %v1214
        %1380 = vmatprep.subr.mxu0 0.0
        %1381 = vmatpush1.xpose.msra.mxu0 %v1217
        %1382 = vmatprep.subr.mxu0 0.0
        %1383 = vmatpush1.xpose.msra.mxu0 %v1220
        %1384 = vmatprep.subr.mxu0 0.0
        %1385 = vmatpush1.xpose.msra.mxu0 %v1223
        %1386 = vmatprep.subr.mxu0 0.0
        %1387 = vmatpush1.xpose.msra.mxu0 %v1226
        %1388 = vmatprep.subr.mxu0 0.0
        %1389 = vmatpush1.xpose.msra.mxu0 %v1229
        %1390 = vmatprep.subr.mxu0 0.0
        %1391 = vmatpush1.xpose.msra.mxu0 %v1232
        %1392 = vmatprep.subr.mxu0 0.0
        %1393 = vmatpush1.xpose.msra.mxu0 %v1235
        %1394 = vmatprep.subr.mxu0 0.0
        %1395 = vmatpush1.xpose.msra.mxu0 %v1238
        %1396 = vmatprep.subr.mxu0 0.0
        %1397 = vmatpush1.xpose.msra.mxu0 %v1241
        %1398 = vmatprep.subr.mxu0 0.0
        %1399 = vmatpush1.xpose.msra.mxu0 %v1244
        %1400 = vmatprep.subr.mxu0 0.0
        %1401 = vmatpush1.xpose.msra.mxu0 %v1247
        %1402 = vmatprep.subr.mxu0 0.0
        %1403 = vmatpush1.xpose.msra.mxu0 %v1250
        %1404 = vmatprep.subr.mxu0 0.0
        %1405 = vmatpush1.xpose.msra.mxu0 %v1253
        %1406 = vmatprep.subr.mxu0 0.0
        %1407 = vmatpush1.xpose.msra.mxu0 %v1256
        %1408 = vmatprep.subr.mxu0 0.0
        %1409 = vmatpush1.xpose.msra.mxu0 %v1259
        %1410 = vmatprep.subr.mxu0 0.0
        %1411 = vmatpush1.xpose.msra.mxu0 %v1262
        %1412 = vmatprep.subr.mxu0 0.0
        %1413 = vmatpush1.xpose.msra.mxu0 %v1265
        %1414 = vmatprep.subr.mxu0 0.0
        %1415 = vmatpush1.xpose.msra.mxu0 %v1268
        %1416 = vmatprep.subr.mxu0 0.0
        %1417 = vmatpush1.xpose.msra.mxu0 %v1271
        %1418 = vmatprep.subr.mxu0 0.0
        %1419 = vmatpush1.xpose.msra.mxu0 %v1274
        %1420 = vmatprep.subr.mxu0 0.0
        %1421 = vmatpush1.xpose.msra.mxu0 %v1277
        %1422 = vmatprep.subr.mxu0 0.0
        %1423 = vmatpush1.xpose.msra.mxu0 %v1280
        %1424 = vmatprep.subr.mxu0 0.0
        %1425 = vmatpush1.xpose.msra.mxu0 %v1283
        %1426 = vmatprep.subr.mxu0 0.0
        %1427 = vmatpush1.xpose.msra.mxu0 %v1286
        %1428 = vmatprep.subr.mxu0 0.0
        %1429 = vmatpush1.xpose.msra.mxu0 %v1289
        %1430 = vmatprep.subr.mxu0 0.0
        %1431 = vmatpush1.xpose.msra.mxu0 %v1292
        %1432 = vmatprep.subr.mxu0 0.0
        %1433 = vmatpush1.xpose.msra.mxu0 %v1295
        %1434 = vmatprep.subr.mxu0 0.0
        %1435 = vmatpush1.xpose.msra.mxu0 %v1298
        %1436 = vmatprep.subr.mxu0 0.0
        %1437 = vmatpush1.xpose.msra.mxu0 %v1301
        %1438 = vmatprep.mubr.f32.mxu0 0.0
        %1439 = vmatmul.mubr.f32.gmra.mrb[0].mxu0 %v1109
        %v1440 = vpop.f32.mrb[0].mxu0
        %v1441 = vadd.f32 0.0, %v1440
        %v1442 = vpop.f32.mrb[0].mxu0
        %v1443 = vadd.f32 0.0, %v1442
        %1444 = vdwg.mxu0
        %v1449 = vcombine.low %v1370, %v1372
        %v1450 = vcombine.low %v1441, %v1443
        %v1452 = vunpack.c.l.s4 1966171168
        %v1453 = vunpack.c.0.s8 %v1452
        %v1454 = vlaneseq
        %v1455 = vshrl.u32 %v1454, 7
        %v1456 = vsub.s32 %v1453, %v1455
        %v1457 = vrot.slane %v1449, %v1456
        %v1459 = vunpack.c.l.s4 1966171168
        %v1460 = vunpack.c.0.s8 %v1459
        %v1461 = vlaneseq
        %v1462 = vshrl.u32 %v1461, 7
        %v1463 = vsub.s32 %v1460, %v1462
        %v1464 = vrot.slane %v1450, %v1463
        %v1465 = vcombine.low %v1457, %v1464
        %v1467 = vunpack.c.l.s4 1966171168
        %v1468 = vunpack.c.0.s8 %v1467
        %v1469 = vlaneseq
        %v1470 = vshrl.u32 %v1469, 7
        %v1471 = vsub.s32 %v1468, %v1470
        %v1472 = vrot.slane %v1465, %v1471
        %v1474 = vlaneseq
        %vm1475 = vcmp.ge.s32.totalorder %v1474, 0
        %vm1476 = vcmp.lt.s32.totalorder %v1474, 512
        %vm1477 = vmand %vm1475, %vm1476
        %1478 = vst.msk [vmem:[%s242] sm:$0xf] %vm1477, %v1472
        %s1479 = smul.u32 64, %s20
        %p1480 = scmp.lt.s32.totalorder %s1479, 127
        %s1481 = scalar_select %p1480, %s1479, 127
        %s1482 = smul.addr %s1481, 8
        %s1483 = scalar_lea.vmem %s4, %s1482
        %s1484 = sand.u32 %s148, 1
        %s1485 = scalar_lea.sflag [#allocation3], %s1484
        %s1486 = sand.u32 %s148, 1
        %s1487 = smul.addr %s1486, 4
        %s1488 = scalar_lea.vmem [#allocation2], %s1487
        // Predicated region
        $region37: #{tpu_custom_call.1} parent=35 // pred_check
          %p1489 = pneg %p132
        $region38: #{tpu_custom_call.1} parent=35 // pred_check_branch
          %1491 = sbr.rel (%p1489) target = $region40
        $region39: #{tpu_custom_call.1} parent=35 // pred_region
          %s1492 = smul.u32 64, %s20
        $region40: #{tpu_custom_call.1} parent=35 // pred_fallthru
          _
        // Predicated region
        $region41: #{tpu_custom_call.1} parent=35 // pred_check
          %p1493 = pneg %p158
        $region42: #{tpu_custom_call.1} parent=35 // pred_check_branch
          %1495 = sbr.rel (%p1493) target = $region44
        $region43: #{tpu_custom_call.1} parent=35 // pred_region
          %s1496 = smul.u32 4, %s20
          %s1498 = ssub.s32 64, 64
          %1499 = vsyncadd %s1485, %s1498
          %s1500 = smul.addr %s1496, 16
          %s1501 = scalar_lea.hbm %s5, %s1500
          %s1503 = sshll.u32 %s1488, 4
          %s1504 = int_to_ptr.vmem [resolvable:$true] %s1503
          %1506 = dma.vmem_to_hbm [thread:$0]  %s1504, 64, %s1501, %s1485
        $region44: #{tpu_custom_call.1} parent=35 // pred_fallthru
          _
      $region36: #{tpu_custom_call.1} parent=5 // pred_fallthru
        _
      %p1507 = scmp.le.s32.totalorder 2, %s15
      // Predicated region
      $region45: #{tpu_custom_call.1} parent=5 // pred_check
        %p1508 = pneg %p1507
      $region46: #{tpu_custom_call.1} parent=5 // pred_check_branch
        %1510 = sbr.rel (%p1508) target = $region48
      $region47: #{tpu_custom_call.1} parent=5 // pred_region
        %s1511 = ssub.s32 %s15, 2
        // Predicated region
        $region49: #{tpu_custom_call.1} parent=47 // pred_check
          %p1512 = pneg %p138
        $region50: #{tpu_custom_call.1} parent=47 // pred_check_branch
          %1514 = sbr.rel (%p1512) target = $region52
        $region51: #{tpu_custom_call.1} parent=47 // pred_region
          %s1515 = smul.u32 64, %s21
          %p1516 = scmp.lt.s32.totalorder %s1515, 127
          %s1517 = scalar_select %p1516, %s1515, 127
          %s1518 = smul.addr %s1517, 8
          %s1519 = scalar_lea.vmem %s4, %s1518
        $region52: #{tpu_custom_call.1} parent=47 // pred_fallthru
          _
        // Predicated region
        $region53: #{tpu_custom_call.1} parent=47 // pred_check
          %p1520 = pneg %p164
        $region54: #{tpu_custom_call.1} parent=47 // pred_check_branch
          %1522 = sbr.rel (%p1520) target = $region56
        $region55: #{tpu_custom_call.1} parent=47 // pred_region
          %s1523 = sand.u32 %s149, 1
          %s1524 = scalar_lea.sflag [#allocation3], %s1523
          %s1525 = sand.u32 %s149, 1
          %s1526 = smul.addr %s1525, 4
          %s1527 = scalar_lea.vmem [#allocation2], %s1526
          %1528 = dma.done %s1524, 64
        $region56: #{tpu_custom_call.1} parent=47 // pred_fallthru
          _
      $region48: #{tpu_custom_call.1} parent=5 // pred_fallthru
        _
    $region6: #{tpu_custom_call.1} parent=1 // loop_footer
      %s19 = sadd.s32 1, %s15
    $region7: #{tpu_custom_call.1} parent=1 // loop_footer_branch
      %14 = sbr.rel target = $region3
    $region8: #{tpu_custom_call.1} parent=1 // loop_exit
      _
    %1529 = vsyncpa [#allocation3], 1
    %s1530 = scalar_lea.sflag [#allocation3], 1
    %1531 = vsyncpa %s1530, 1

</llo_original>
